<compile_context>
chip_gen: v6e
topology: v6e:2x2x1
jax: 0.10.0
libtpu: 0.0.40
codegen_flags: <defaults>
</compile_context>

<pallas_src>
import functools
import math

import jax
import jax.numpy as jnp
from jax.experimental import pallas as pl
from jax.experimental.pallas import tpu as pltpu

# --- "args" equivalent (small, synthetic sizes) -------------------------------
ARGS_HIDDEN_DIM = 64             # plays the role of args.hidden_dim (=250 in the original)
INPUT_DIM = 2 * ARGS_HIDDEN_DIM  # sample embedding dim (re || im) = 128
CLS_HIDDEN = 32                  # Classifier hidden_dim (default 10 in PyTorch; pick 32)
H_PAD = 128                      # lane-dense padded hidden width used inside the kernel
BATCH = 32
SEQ_LEN = 3                      # head / relation / tail slots

_PI = 3.141592653589793


def _round_up(x, m):
    return (x + m - 1) // m * m


# ------------------------------------------------------------------------------
# Kernel: one batch tile (tm rows) of fused RotatE + classifier head.
# ------------------------------------------------------------------------------
def _classifier_kernel(x_ref, w1_ref, b1_ref, w2_ref, b2_ref, out_ref):
    """x_ref: (tm, 3*D) = [head | relation | tail] per row, D = 2*Dh.
    w1_ref: (D, Hp) sign-folded F1 weights; b1/w2 as (1, Hp) rows; b2 (1, 1)."""
    D = w1_ref.shape[0]
    Dh = D // 2
    # phase_relation = relation / (embed_model / pi), embed_model = (24 + 2) / hidden_dim
    phase_scale = _PI / ((24.0 + 2.0) / Dh)

    # Slot selection: aligned lane slices of the 3*D-wide tile (no wrapper HBM copies).
    head = x_ref[:, 0:D]                              # [re_h | im_h]
    rel = x_ref[:, D:D + Dh]                          # phase part of the relation slot
    tail = x_ref[:, 2 * D:3 * D]                      # [re_t | im_t]

    # RotatE, mode='simple', kept 128-lane dense via half-width rolls (XLU slot).
    phase = rel * phase_scale                         # (tm, Dh)
    rc = jnp.cos(phase)
    rs = jnp.sin(phase)
    rot_cos = jnp.concatenate([rc, rc], axis=1)       # [cos | cos]
    rot_sin = jnp.concatenate([-rs, rs], axis=1)      # [-sin | sin]

    head_sw = pltpu.roll(head, shift=Dh, axis=1)      # [im_h | re_h]
    s = head * rot_cos + head_sw * rot_sin - tail     # [re_s | im_s]
    sq = s * s
    # elementwise 2-norm, duplicated into both halves: [score | score]
    score_dup = jnp.sqrt(sq + pltpu.roll(sq, shift=Dh, axis=1))

    # F1 with cat([s, -s]) folded into sign-flipped rows of W1 (f32 operands: MXU is
    # idle here and f32 keeps parity with the reference).
    h = jnp.dot(score_dup, w1_ref[...],
                preferred_element_type=jnp.float32) + b1_ref[...]
    h = jnp.tanh(h)                                   # (tm, Hp); padded cols stay 0
    # TODO(synk): nn.Dropout(0.3) treated as identity (eval mode); training mask omitted.

    # F2: an N=1 matmul wastes a full MXU pass -> VPU multiply + lane reduction.
    logit = jnp.sum(h * w2_ref[...], axis=-1, keepdims=True) + b2_ref[...]
    out_ref[...] = jax.nn.sigmoid(logit)              # (tm, 1)


# ------------------------------------------------------------------------------
# Wrapper: one pallas_call per sample tensor, batch-tiled grid, resident weights.
# ------------------------------------------------------------------------------
def _classifier_scores(sample, w1s, b1, w2r, b2, *, tm=512):
    """sample: (R, 3, D) float32 -> (R, 1) float32 sigmoid scores."""
    R, L, D = sample.shape
    Hp = w1s.shape[1]

    # Free metadata reshape (contiguous row-major): one input, one DMA per tile.
    x = sample.reshape(R, L * D)

    # Batch tile: large enough to amortize the ~0.35us/step pipeline overhead,
    # clamped to the (sublane-rounded) problem size.  The ragged last tile is masked
    # by Pallas, so no jnp.pad copy of the input.
    tm = max(8, min(_round_up(tm, 8), _round_up(R, 8)))
    grid = pl.cdiv(R, tm)

    return pl.pallas_call(
        _classifier_kernel,
        out_shape=jax.ShapeDtypeStruct((R, 1), jnp.float32),
        grid=(grid,),
        in_specs=[
            pl.BlockSpec((tm, L * D), lambda i: (i, 0)),   # fused sample tile
            pl.BlockSpec((D, Hp), lambda i: (0, 0)),       # W1 (sign-folded), resident
            pl.BlockSpec((1, Hp), lambda i: (0, 0)),       # b1
            pl.BlockSpec((1, Hp), lambda i: (0, 0)),       # w2 as row
            pl.BlockSpec((1, 1), lambda i: (0, 0)),        # b2
        ],
        out_specs=pl.BlockSpec((tm, 1), lambda i: (i, 0)),
        compiler_params=pltpu.CompilerParams(
            dimension_semantics=("parallel",),             # megacore sharding on v7x
            vmem_limit_bytes=32 * 1024 * 1024,             # explicit; safe on all gens
        ),
    )(x, w1s, b1, w2r, b2)


def classifier_forward(positive_sample, negative_sample, params, *, tm=512):
    """Matches Classifier.forward: returns (positive_score, negative_score), each (B, 1).

    pos/neg are two independent pallas_calls (no jnp.concatenate fusion copy of the
    2B*3*D inputs; the second ~us launch is cheaper than an extra HBM pass)."""
    w1s, b1, w2r, b2 = params
    pos = _classifier_scores(positive_sample, w1s, b1, w2r, b2, tm=tm)
    neg = _classifier_scores(negative_sample, w1s, b1, w2r, b2, tm=tm)
    return pos, neg


# ------------------------------------------------------------------------------
# Parameter init / preprocessing
# ------------------------------------------------------------------------------
def init_params(key, input_dim, hidden_dim):
    """Deterministic PyTorch-Linear-style init: U(-1/sqrt(fan_in), 1/sqrt(fan_in))."""
    k1, k2, k3, k4 = jax.random.split(key, 4)
    bound1 = 1.0 / math.sqrt(input_dim)
    bound2 = 1.0 / math.sqrt(hidden_dim)
    w1 = jax.random.uniform(k1, (input_dim, hidden_dim), jnp.float32, -bound1, bound1)
    b1 = jax.random.uniform(k2, (1, hidden_dim), jnp.float32, -bound1, bound1)
    w2 = jax.random.uniform(k3, (hidden_dim, 1), jnp.float32, -bound2, bound2)
    b2 = jax.random.uniform(k4, (1, 1), jnp.float32, -bound2, bound2)
    return w1, b1, w2, b2


def prepare_params(w1, b1, w2, b2, *, h_pad=H_PAD):
    """Fold cat([s,-s]) into sign-flipped W1 rows and zero-pad the hidden dim.

    dot(cat([s, -s]), W1) == dot([s | s], concat([W1[:Dh], -W1[Dh:]], axis=0)),
    which lets the kernel keep the duplicated 128-lane score without any half-vreg
    slicing.  Padded hidden columns get b1 = 0 and w2 = 0, so tanh(0) * 0 contributes
    nothing -> output identical to the unpadded module.
    """
    D, H = w1.shape
    Dh = D // 2
    Hp = _round_up(max(H, h_pad), 128)
    w1_signed = jnp.concatenate([w1[:Dh, :], -w1[Dh:, :]], axis=0)   # (D, H), f32
    w1p = jnp.zeros((D, Hp), jnp.float32).at[:, :H].set(w1_signed)
    b1p = jnp.zeros((1, Hp), jnp.float32).at[:, :H].set(b1.reshape(1, H))
    w2p = jnp.zeros((1, Hp), jnp.float32).at[:, :H].set(w2.reshape(1, H))
    b2p = b2.reshape(1, 1).astype(jnp.float32)
    return w1p, b1p, w2p, b2p


# ------------------------------------------------------------------------------
# Pure-JAX reference (mirrors the PyTorch module exactly) for a sanity check.
# ------------------------------------------------------------------------------
def _reference_forward(positive_sample, negative_sample, raw_params):
    w1, b1, w2, b2 = raw_params
    phase_scale = _PI / ((24.0 + 2.0) / ARGS_HIDDEN_DIM)

    def score(sample):
        head = sample[:, 0, :]
        rel = sample[:, 1, :ARGS_HIDDEN_DIM]
        tail = sample[:, 2, :]
        Dh = head.shape[1] // 2
        re_h, im_h = head[:, :Dh], head[:, Dh:]
        re_t, im_t = tail[:, :Dh], tail[:, Dh:]
        phase = rel * phase_scale
        re_r, im_r = jnp.cos(phase), jnp.sin(phase)
        re_s = re_h * re_r - im_h * im_r - re_t
        im_s = re_h * im_r + im_h * re_r - im_t
        s = jnp.sqrt(re_s * re_s + im_s * im_s)
        feat = jnp.concatenate([s, -s], axis=-1)
        h = jnp.tanh(feat @ w1 + b1)
        return jax.nn.sigmoid(h @ w2 + b2)

    return score(positive_sample), score(negative_sample)


if __name__ == "__main__":
    key = jax.random.PRNGKey(0)
    k_pos, k_neg, k_params = jax.random.split(key, 3)

    positive_sample = jax.random.normal(k_pos, (BATCH, SEQ_LEN, INPUT_DIM), jnp.float32)
    negative_sample = jax.random.normal(k_neg, (BATCH, SEQ_LEN, INPUT_DIM), jnp.float32)
    raw_params = init_params(k_params, INPUT_DIM, CLS_HIDDEN)
    params = prepare_params(*raw_params)

    # tm=16 at this toy size (B=32) so each call's batch grid runs 2 pipelined steps;
    # production default is tm=512.
    fwd = jax.jit(functools.partial(classifier_forward, tm=16))
    pos_score, neg_score = fwd(positive_sample, negative_sample, params)
    jax.block_until_ready((pos_score, neg_score))

    assert pos_score.shape == (BATCH, 1) and neg_score.shape == (BATCH, 1)
    assert bool(jnp.all((pos_score >= 0) & (pos_score <= 1)))
    assert bool(jnp.all((neg_score >= 0) & (neg_score <= 1)))

    # Tight sanity check against the f32 reference (kernel math is all f32 now).
    ref_pos, ref_neg = _reference_forward(positive_sample, negative_sample, raw_params)
    assert float(jnp.max(jnp.abs(pos_score - ref_pos))) < 1e-3
    assert float(jnp.max(jnp.abs(neg_score - ref_neg))) < 1e-3

    print("KERNEL_OK")
</pallas_src>

<mosaic_0001>
module attributes {stable_mosaic.version = 11 : i64} {
  func.func @_classifier_kernel(%arg0: i32, %arg1: memref<16x384xf32, #tpu.memory_space<vmem>>, %arg2: memref<128x128xf32, #tpu.memory_space<vmem>>, %arg3: memref<1x128xf32, #tpu.memory_space<vmem>>, %arg4: memref<1x128xf32, #tpu.memory_space<vmem>>, %arg5: memref<1x1xf32, #tpu.memory_space<vmem>>, %arg6: memref<16x1xf32, #tpu.memory_space<vmem>>) attributes {dimension_semantics = [#tpu.dimension_semantics<parallel>], iteration_bounds = array<i64: 2>, scalar_prefetch = 0 : i64, scratch_operands = 0 : i64, tpu.core_type = #tpu.core_type<tc>, window_params = [{transform_indices = @transform_0, window_bounds = array<i64: 16, 384>}, {pipeline_mode = #tpu.pipeline_mode<synchronous>, transform_indices = @transform_1, window_bounds = array<i64: 128, 128>}, {pipeline_mode = #tpu.pipeline_mode<synchronous>, transform_indices = @transform_2, window_bounds = array<i64: 1, 128>}, {pipeline_mode = #tpu.pipeline_mode<synchronous>, transform_indices = @transform_3, window_bounds = array<i64: 1, 128>}, {pipeline_mode = #tpu.pipeline_mode<synchronous>, transform_indices = @transform_4, window_bounds = array<i64: 1, 1>}, {transform_indices = @transform_5, window_bounds = array<i64: 16, 1>}]} {
    %c0 = arith.constant 0 : index
    %c0_0 = arith.constant 0 : index
    %0 = vector.load %arg1[%c0, %c0_0] : memref<16x384xf32, #tpu.memory_space<vmem>>, vector<16x128xf32>
    %c0_1 = arith.constant 0 : index
    %c128 = arith.constant 128 : index
    %1 = vector.load %arg1[%c0_1, %c128] : memref<16x384xf32, #tpu.memory_space<vmem>>, vector<16x64xf32>
    %c0_2 = arith.constant 0 : index
    %c256 = arith.constant 256 : index
    %2 = vector.load %arg1[%c0_2, %c256] : memref<16x384xf32, #tpu.memory_space<vmem>>, vector<16x128xf32>
    %cst = arith.constant 7.73315096 : f32
    %3 = vector.broadcast %cst : f32 to vector<16x64xf32>
    %4 = arith.mulf %1, %3 : vector<16x64xf32>
    %5 = math.cos %4 : vector<16x64xf32>
    %6 = math.sin %4 : vector<16x64xf32>
    %7 = tpu.concatenate %5, %5 in 1 : vector<16x64xf32>, vector<16x64xf32> -> vector<16x128xf32>
    %cst_3 = arith.constant 0.000000e+00 : f32
    %8 = vector.broadcast %cst_3 : f32 to vector<16x64xf32>
    %9 = arith.subf %8, %6 : vector<16x64xf32>
    %10 = tpu.concatenate %9, %6 in 1 : vector<16x64xf32>, vector<16x64xf32> -> vector<16x128xf32>
    %c64_i32 = arith.constant 64 : i32
    %11 = tpu.dynamic_rotate %0 by %c64_i32 dim 1 : vector<16x128xf32>, i32 -> vector<16x128xf32>
    %12 = arith.mulf %0, %7 : vector<16x128xf32>
    %13 = arith.mulf %11, %10 : vector<16x128xf32>
    %14 = arith.addf %12, %13 : vector<16x128xf32>
    %15 = arith.subf %14, %2 : vector<16x128xf32>
    %16 = arith.mulf %15, %15 : vector<16x128xf32>
    %c64_i32_4 = arith.constant 64 : i32
    %17 = tpu.dynamic_rotate %16 by %c64_i32_4 dim 1 : vector<16x128xf32>, i32 -> vector<16x128xf32>
    %18 = arith.addf %16, %17 : vector<16x128xf32>
    %19 = math.sqrt %18 : vector<16x128xf32>
    %c0_5 = arith.constant 0 : index
    %c0_6 = arith.constant 0 : index
    %20 = vector.load %arg2[%c0_5, %c0_6] : memref<128x128xf32, #tpu.memory_space<vmem>>, vector<128x128xf32>
    %cst_7 = arith.constant dense<0.000000e+00> : vector<16x128xf32>
    %21 = tpu.matmul %19, %20, %cst_7 {dimension_numbers = #tpu.dot_dimension_numbers<[1], [0], [0], [1], [0, 0, 1, 1], [], []>} : vector<16x128xf32>, vector<128x128xf32>, vector<16x128xf32> -> vector<16x128xf32>
    %c0_8 = arith.constant 0 : index
    %c0_9 = arith.constant 0 : index
    %22 = vector.load %arg3[%c0_8, %c0_9] : memref<1x128xf32, #tpu.memory_space<vmem>>, vector<1x128xf32>
    %23 = vector.broadcast %22 : vector<1x128xf32> to vector<16x128xf32>
    %24 = arith.addf %21, %23 : vector<16x128xf32>
    %25 = math.tanh %24 : vector<16x128xf32>
    %c0_10 = arith.constant 0 : index
    %c0_11 = arith.constant 0 : index
    %26 = vector.load %arg4[%c0_10, %c0_11] : memref<1x128xf32, #tpu.memory_space<vmem>>, vector<1x128xf32>
    %27 = vector.broadcast %26 : vector<1x128xf32> to vector<16x128xf32>
    %28 = arith.mulf %25, %27 : vector<16x128xf32>
    %cst_12 = arith.constant dense<0.000000e+00> : vector<16xf32>
    %29 = vector.multi_reduction <add>, %28, %cst_12 [1] : vector<16x128xf32> to vector<16xf32>
    %30 = vector.shape_cast %29 : vector<16xf32> to vector<16x1xf32>
    %c0_13 = arith.constant 0 : index
    %c0_14 = arith.constant 0 : index
    %31 = vector.load %arg5[%c0_13, %c0_14] : memref<1x1xf32, #tpu.memory_space<vmem>>, vector<1x1xf32>
    %32 = vector.broadcast %31 : vector<1x1xf32> to vector<16x1xf32>
    %33 = arith.addf %30, %32 : vector<16x1xf32>
    %34 = arith.negf %33 : vector<16x1xf32>
    %35 = math.exp %34 : vector<16x1xf32>
    %cst_15 = arith.constant 1.000000e+00 : f32
    %36 = vector.broadcast %cst_15 : f32 to vector<16x1xf32>
    %37 = arith.addf %36, %35 : vector<16x1xf32>
    %38 = arith.divf %36, %37 : vector<16x1xf32>
    %c0_16 = arith.constant 0 : index
    %c0_17 = arith.constant 0 : index
    %39 = vector.load %arg6[%c0_16, %c0_17] : memref<16x1xf32, #tpu.memory_space<vmem>>, vector<16x1xf32>
    tpu.vector_store %arg6[%c0_16, %c0_17], %38 {strides = array<i32>} : memref<16x1xf32, #tpu.memory_space<vmem>>, vector<16x1xf32>,
    return
  }
  func.func @transform_0(%arg0: i32) -> (i32, i32) {
    %c0_i32 = arith.constant 0 : i32
    %c0_i32_0 = arith.constant 0 : i32
    return %arg0, %c0_i32 : i32, i32
  }
  func.func @transform_1(%arg0: i32) -> (i32, i32) {
    %c0_i32 = arith.constant 0 : i32
    %c0_i32_0 = arith.constant 0 : i32
    %c0_i32_1 = arith.constant 0 : i32
    return %c0_i32, %c0_i32_0 : i32, i32
  }
  func.func @transform_2(%arg0: i32) -> (i32, i32) {
    %c0_i32 = arith.constant 0 : i32
    %c0_i32_0 = arith.constant 0 : i32
    %c0_i32_1 = arith.constant 0 : i32
    return %c0_i32, %c0_i32_0 : i32, i32
  }
  func.func @transform_3(%arg0: i32) -> (i32, i32) {
    %c0_i32 = arith.constant 0 : i32
    %c0_i32_0 = arith.constant 0 : i32
    %c0_i32_1 = arith.constant 0 : i32
    return %c0_i32, %c0_i32_0 : i32, i32
  }
  func.func @transform_4(%arg0: i32) -> (i32, i32) {
    %c0_i32 = arith.constant 0 : i32
    %c0_i32_0 = arith.constant 0 : i32
    %c0_i32_1 = arith.constant 0 : i32
    return %c0_i32, %c0_i32_0 : i32, i32
  }
  func.func @transform_5(%arg0: i32) -> (i32, i32) {
    %c0_i32 = arith.constant 0 : i32
    %c0_i32_0 = arith.constant 0 : i32
    return %arg0, %c0_i32 : i32, i32
  }
}

</mosaic_0001>

<llo_original>
// kernel: classifier_forward.2
$region0: #{classifier_forward.2}
  #allocation0 [shape = 'u32[]', space=smem, size = 0x4, offset = 0x4, fixed_abs, tag = 'smem constant byte address 0x4 - core index']
  #allocation1 [shape = 'u32[144,128]{1,0:T(1,128)}', space=vmem, size = 0x12000, scoped, tag = 'internal scratch']
  #allocation2 [shape = 'f32[1,1]{1,0:T(1,128)S(1)}', space=vmem, size = 0x200, scoped, tag = 'scoped memory for classifier_forward.2']
  %s0 = inlined_call_operand.vmem [shape: f32[32,384], index: 0, kind: input, shape index: {}]
  %s1 = inlined_call_operand.vmem [shape: f32[128,128], index: 1, kind: input, shape index: {}]
  %s2 = inlined_call_operand.vmem [shape: f32[1,128], index: 2, kind: input, shape index: {}]
  %s3 = inlined_call_operand.vmem [shape: f32[1,128], index: 3, kind: input, shape index: {}]
  %s4 = inlined_call_operand.<no memory space> [shape: f32[1,1], index: 4, kind: input, shape index: {}]
  %s5 = inlined_call_operand.vmem [shape: f32[32,1], index: 5, kind: output, shape index: {}]
  %s6 = sld [smem:[#allocation0]]
  $region53: #{classifier_forward.2} parent=0
    _
  %s8 = ssub.s32 1, %s6
  %s9 = scalar_select 0, %s8, %s6
  %v10 = vstv %s4
  %11 = vst [vmem:[#allocation2] sm:$0x1] %v10
  loop: start=0, step=1, limit=4
  $region2: #{classifier_forward.2} parent=0 // loop_pre_header
    _
  $region3: #{classifier_forward.2} parent=0 // loop_header
    %s13 = sphi 0, %s17
    %p14 = scmp.ge.s32.totalorder %s13, 4
    %s23 = sphi 0, %s25
    %s26 = sphi 0, %s23
    %s27 = sphi 0, %s26
    %s43 = sphi 0, %s27
    %s47 = sphi 0, %s47
    %s49 = sphi 0, %s47
    %s50 = sphi 0, %s49
    %s64 = sphi 0, %s50
    %s68 = sphi 0, %s68
    %s70 = sphi 0, %s68
    %s71 = sphi 0, %s70
    %s85 = sphi 0, %s71
    %s89 = sphi 0, %s89
    %s91 = sphi 0, %s89
    %s92 = sphi 0, %s91
    %s106 = sphi 0, %s92
    %s110 = sphi 0, %s110
    %s112 = sphi 0, %s110
    %s113 = sphi 0, %s112
    %s127 = sphi 0, %s113
    %s133 = sphi 0, %s135
    %s136 = sphi 0, %s133
    %s137 = sphi 0, %s136
    %s153 = sphi 0, %s137
  $region4: #{classifier_forward.2} parent=0 // loop_header_branch
    %16 = sbr.rel (%p14) target = $region8
  $region5: #{classifier_forward.2} parent=0 // loop_body
    %s18 = ssub.s32 %s13, 1
    %s19 = ssub.s32 %s13, 2
    %s20 = sadd.s32 %s13, 1
    %s21 = ssub.s32 %s13, %s20
    %p22 = scmp.eq.s32.totalorder %s21, 0
    %s24 = sadd.s32 %s23, 1
    %s25 = scalar_select %p22, %s23, %s24
    %p28 = pneg %p22
    %p29 = scmp.eq.s32.totalorder %s13, 1
    %p30 = por %p28, %p29
    %p31 = scmp.ne.s32.totalorder %s23, %s26
    %p32 = scmp.eq.s32.totalorder %s13, 0
    %p33 = por %p31, %p32
    %p34 = scmp.ne.s32.totalorder %s23, %s26
    %p35 = scmp.eq.s32.totalorder %s18, 1
    %p36 = por %p34, %p35
    %p37 = scmp.ne.s32.totalorder %s26, %s27
    %p38 = scmp.eq.s32.totalorder %s18, 0
    %p39 = por %p37, %p38
    %p40 = scmp.ne.s32.totalorder %s26, %s27
    %p41 = scmp.eq.s32.totalorder %s19, 1
    %p42 = por %p40, %p41
    %p44 = scmp.ne.s32.totalorder %s27, %s43
    %p45 = scmp.eq.s32.totalorder %s19, 0
    %p46 = por %p44, %p45
    %s48 = sadd.s32 %s47, 1
    %p51 = scmp.eq.s32.totalorder %s13, 1
    %p52 = scmp.ne.s32.totalorder %s47, %s49
    %p53 = scmp.eq.s32.totalorder %s13, 0
    %p54 = por %p52, %p53
    %p55 = scmp.ne.s32.totalorder %s47, %s49
    %p56 = scmp.eq.s32.totalorder %s18, 1
    %p57 = por %p55, %p56
    %p58 = scmp.ne.s32.totalorder %s49, %s50
    %p59 = scmp.eq.s32.totalorder %s18, 0
    %p60 = por %p58, %p59
    %p61 = scmp.ne.s32.totalorder %s49, %s50
    %p62 = scmp.eq.s32.totalorder %s19, 1
    %p63 = por %p61, %p62
    %p65 = scmp.ne.s32.totalorder %s50, %s64
    %p66 = scmp.eq.s32.totalorder %s19, 0
    %p67 = por %p65, %p66
    %s69 = sadd.s32 %s68, 1
    %p72 = scmp.eq.s32.totalorder %s13, 1
    %p73 = scmp.ne.s32.totalorder %s68, %s70
    %p74 = scmp.eq.s32.totalorder %s13, 0
    %p75 = por %p73, %p74
    %p76 = scmp.ne.s32.totalorder %s68, %s70
    %p77 = scmp.eq.s32.totalorder %s18, 1
    %p78 = por %p76, %p77
    %p79 = scmp.ne.s32.totalorder %s70, %s71
    %p80 = scmp.eq.s32.totalorder %s18, 0
    %p81 = por %p79, %p80
    %p82 = scmp.ne.s32.totalorder %s70, %s71
    %p83 = scmp.eq.s32.totalorder %s19, 1
    %p84 = por %p82, %p83
    %p86 = scmp.ne.s32.totalorder %s71, %s85
    %p87 = scmp.eq.s32.totalorder %s19, 0
    %p88 = por %p86, %p87
    %s90 = sadd.s32 %s89, 1
    %p93 = scmp.eq.s32.totalorder %s13, 1
    %p94 = scmp.ne.s32.totalorder %s89, %s91
    %p95 = scmp.eq.s32.totalorder %s13, 0
    %p96 = por %p94, %p95
    %p97 = scmp.ne.s32.totalorder %s89, %s91
    %p98 = scmp.eq.s32.totalorder %s18, 1
    %p99 = por %p97, %p98
    %p100 = scmp.ne.s32.totalorder %s91, %s92
    %p101 = scmp.eq.s32.totalorder %s18, 0
    %p102 = por %p100, %p101
    %p103 = scmp.ne.s32.totalorder %s91, %s92
    %p104 = scmp.eq.s32.totalorder %s19, 1
    %p105 = por %p103, %p104
    %p107 = scmp.ne.s32.totalorder %s92, %s106
    %p108 = scmp.eq.s32.totalorder %s19, 0
    %p109 = por %p107, %p108
    %s111 = sadd.s32 %s110, 1
    %p114 = scmp.eq.s32.totalorder %s13, 1
    %p115 = scmp.ne.s32.totalorder %s110, %s112
    %p116 = scmp.eq.s32.totalorder %s13, 0
    %p117 = por %p115, %p116
    %p118 = scmp.ne.s32.totalorder %s110, %s112
    %p119 = scmp.eq.s32.totalorder %s18, 1
    %p120 = por %p118, %p119
    %p121 = scmp.ne.s32.totalorder %s112, %s113
    %p122 = scmp.eq.s32.totalorder %s18, 0
    %p123 = por %p121, %p122
    %p124 = scmp.ne.s32.totalorder %s112, %s113
    %p125 = scmp.eq.s32.totalorder %s19, 1
    %p126 = por %p124, %p125
    %p128 = scmp.ne.s32.totalorder %s113, %s127
    %p129 = scmp.eq.s32.totalorder %s19, 0
    %p130 = por %p128, %p129
    %s131 = ssub.s32 %s13, %s20
    %p132 = scmp.eq.s32.totalorder %s131, 0
    %s134 = sadd.s32 %s133, 1
    %s135 = scalar_select %p132, %s133, %s134
    %p138 = pneg %p132
    %p139 = scmp.eq.s32.totalorder %s13, 1
    %p140 = por %p138, %p139
    %p141 = scmp.ne.s32.totalorder %s133, %s136
    %p142 = scmp.eq.s32.totalorder %s13, 0
    %p143 = por %p141, %p142
    %p144 = scmp.ne.s32.totalorder %s133, %s136
    %p145 = scmp.eq.s32.totalorder %s18, 1
    %p146 = por %p144, %p145
    %p147 = scmp.ne.s32.totalorder %s136, %s137
    %p148 = scmp.eq.s32.totalorder %s18, 0
    %p149 = por %p147, %p148
    %p150 = scmp.ne.s32.totalorder %s136, %s137
    %p151 = scmp.eq.s32.totalorder %s19, 1
    %p152 = por %p150, %p151
    %p154 = scmp.ne.s32.totalorder %s137, %s153
    %p155 = scmp.eq.s32.totalorder %s19, 0
    %p156 = por %p154, %p155
    %p157 = scmp.le.s32.totalorder 1, %s13
    %p158 = scmp.lt.s32.totalorder %s13, 3
    %p159 = pnand %p157, %p158
    %p160 = pneg %p159
    // Predicated region
    $region9: #{classifier_forward.2} parent=5 // pred_check
      _
    $region10: #{classifier_forward.2} parent=5 // pred_check_branch
      %162 = sbr.rel (%p159) target = $region12
    $region11: #{classifier_forward.2} parent=5 // pred_region
      %s163 = ssub.s32 %s13, 1
      // Predicated region
      $region13: #{classifier_forward.2} parent=11 // pred_check
        %p164 = pneg %p60
      $region14: #{classifier_forward.2} parent=11 // pred_check_branch
        %166 = sbr.rel (%p164) target = $region16
      $region15: #{classifier_forward.2} parent=11 // pred_region
        _
      $region16: #{classifier_forward.2} parent=11 // pred_fallthru
        _
      // Predicated region
      $region17: #{classifier_forward.2} parent=11 // pred_check
        %p167 = pneg %p81
      $region18: #{classifier_forward.2} parent=11 // pred_check_branch
        %169 = sbr.rel (%p167) target = $region20
      $region19: #{classifier_forward.2} parent=11 // pred_region
        _
      $region20: #{classifier_forward.2} parent=11 // pred_fallthru
        _
      // Predicated region
      $region21: #{classifier_forward.2} parent=11 // pred_check
        %p170 = pneg %p102
      $region22: #{classifier_forward.2} parent=11 // pred_check_branch
        %172 = sbr.rel (%p170) target = $region24
      $region23: #{classifier_forward.2} parent=11 // pred_region
        _
      $region24: #{classifier_forward.2} parent=11 // pred_fallthru
        _
      // Predicated region
      $region25: #{classifier_forward.2} parent=11 // pred_check
        %p173 = pneg %p123
      $region26: #{classifier_forward.2} parent=11 // pred_check_branch
        %175 = sbr.rel (%p173) target = $region28
      $region27: #{classifier_forward.2} parent=11 // pred_region
        _
      $region28: #{classifier_forward.2} parent=11 // pred_fallthru
        _
    $region12: #{classifier_forward.2} parent=5 // pred_fallthru
      _
    %p176 = scmp.lt.s32.totalorder %s13, 2
    // Predicated region
    $region29: #{classifier_forward.2} parent=5 // pred_check
      %p177 = pneg %p176
    $region30: #{classifier_forward.2} parent=5 // pred_check_branch
      %179 = sbr.rel (%p177) target = $region32
    $region31: #{classifier_forward.2} parent=5 // pred_region
      // Predicated region
      $region33: #{classifier_forward.2} parent=31 // pred_check
        %p180 = pneg %p33
      $region34: #{classifier_forward.2} parent=31 // pred_check_branch
        %182 = sbr.rel (%p180) target = $region36
      $region35: #{classifier_forward.2} parent=31 // pred_region
        %s183 = smul.u32 2, %s13
        %p184 = scmp.lt.s32.totalorder %s183, 3
        %s185 = scalar_select %p184, %s183, 3
        %s186 = smul.addr %s185, 3
        %s187 = smul.addr %s186, 8
        %s188 = scalar_lea.vmem %s0, %s187
        %s189 = smul.u32 2, %s13
      $region36: #{classifier_forward.2} parent=31 // pred_fallthru
        _
    $region32: #{classifier_forward.2} parent=5 // pred_fallthru
      _
    %p190 = scmp.le.s32.totalorder 1, %s13
    %p191 = scmp.lt.s32.totalorder %s13, 3
    %p192 = pnand %p190, %p191
    %p193 = pneg %p192
    // Predicated region
    $region37: #{classifier_forward.2} parent=5 // pred_check
      _
    $region38: #{classifier_forward.2} parent=5 // pred_check_branch
      %195 = sbr.rel (%p192) target = $region40
    $region39: #{classifier_forward.2} parent=5 // pred_region
      %s196 = ssub.s32 %s13, 1
      %s197 = smul.u32 2, %s18
      %p198 = scmp.lt.s32.totalorder %s197, 3
      %s199 = scalar_select %p198, %s197, 3
      %s200 = smul.addr %s199, 3
      %s201 = smul.addr %s200, 8
      %s202 = scalar_lea.vmem %s0, %s201
      %p203 = pneg %p39
      %p204 = pneg %p36
      %p205 = pneg %p60
      %p206 = pneg %p57
      %p207 = pneg %p81
      %p208 = pneg %p78
      %p209 = pneg %p102
      %p210 = pneg %p99
      %p211 = pneg %p123
      %p212 = pneg %p120
      %p213 = pneg %p149
      %p214 = pneg %p146
      %s215 = smul.u32 2, %s18
      %p216 = scmp.lt.s32.totalorder %s215, 3
      %s217 = scalar_select %p216, %s215, 3
      %s218 = smul.addr %s217, 8
      %s219 = scalar_lea.vmem %s5, %s218
      %s220 = smul.u32 2, %s18
      %p221 = scmp.lt.s32.totalorder %s220, 3
      %s222 = scalar_select %p221, %s220, 3
      %s223 = smul.addr %s222, 3
      %s224 = smul.addr %s223, 8
      %s225 = scalar_lea.vmem %s0, %s224
      %s226 = smul.u32 2, %s18
      %s227 = smul.u32 2, %s18
      %p228 = scmp.lt.s32.totalorder %s227, 3
      %s229 = scalar_select %p228, %s227, 3
      %s230 = smul.addr %s229, 8
      %s231 = scalar_lea.vmem %s5, %s230
      %s232 = smul.u32 2, %s18
      %v233 = vld [vmem:[%s225] sm:$0xff]
      %v234 = vld [vmem:[%s225 + $0x18] sm:$0xff]
      %v235 = vld [vmem:[%s225 + $0x8] sm:$0xff]
      %v236 = vld [vmem:[%s225 + $0x20] sm:$0xff]
      %v237 = vld [vmem:[%s225 + $0x10] sm:$0xff]
      %v238 = vld [vmem:[%s225 + $0x28] sm:$0xff]
      %v239 = vmul.f32 %v235, 7.733151
      %v240 = vmul.f32 %v236, 7.733151
      %v241 = vand.u32 2147483647, %v239
      %vm242 = vcmp.le.f32.partialorder %v241, 0.7853982
      %vm243 = vcmp.lt.s32.totalorder %v239, 0
      %v244 = vand.u32 %v239, 2139095040
      %v245 = vshrl.u32 %v244, 23
      %v246 = vsub.s32 %v245, 127
      %v247 = vand.u32 2147483647, %v239
      %v248 = vand.u32 %v247, 8388607
      %v249 = vor.u32 %v248, 8388608
      %v250 = vsub.s32 0, %v249
      %v251 = vadd.s32 %v246, 1
      %vm252 = vcmp.gt.s32.totalorder %v251, 0
      %v253 = vsel %vm252, %v251, 0
      %v254 = vshrl.u32 %v253, 5
      %v255 = vand.u32 %v253, 31
      %v256 = vsub.s32 32, %v255
      %v257 = vshrl.u32 683565275, %v256
      %v258 = vshll.u32 683565275, %v255
      %v259 = vshrl.u32 2475754826, %v256
      %v260 = vor.u32 %v258, %v259
      %v261 = vshll.u32 2475754826, %v255
      %v262 = vshrl.u32 2131351028, %v256
      %v263 = vor.u32 %v261, %v262
      %v264 = vshll.u32 2131351028, %v255
      %v265 = vshrl.u32 2102212464, %v256
      %v266 = vor.u32 %v264, %v265
      %v267 = vshll.u32 2102212464, %v255
      %v268 = vshrl.u32 920167782, %v256
      %v269 = vor.u32 %v267, %v268
      %v270 = vshll.u32 920167782, %v255
      %v271 = vshrl.u32 1326507024, %v256
      %v272 = vor.u32 %v270, %v271
      %vm273 = vcmp.lt.s32.totalorder %v254, 1
      %vm274 = vcmp.lt.s32.totalorder %v254, 2
      %vm275 = vcmp.lt.s32.totalorder %v254, 3
      %vm276 = vcmp.lt.s32.totalorder %v254, 4
      %v277 = vsel %vm273, %v257, %v260
      %v278 = vsel %vm276, %v266, 2102212464
      %v279 = vsel %vm275, %v263, %v278
      %v280 = vsel %vm274, %v277, %v279
      %v281 = vsel %vm273, %v260, %v263
      %v282 = vsel %vm276, %v269, 920167782
      %v283 = vsel %vm275, %v266, %v282
      %v284 = vsel %vm274, %v281, %v283
      %v285 = vsel %vm273, %v263, %v266
      %v286 = vsel %vm276, %v272, 1326507024
      %v287 = vsel %vm275, %v269, %v286
      %v288 = vsel %vm274, %v285, %v287
      %v289 = vshll.u32 %v249, 8
      %v290 = vmul.u32.u64.compose %v289, %v288
      %v291 = vextract.low.u32 %v290
      %v292 = vextract.high.u32 %v290
      %v293 = vmul.u32.u64.compose %v289, %v284
      %v294 = vextract.low.u32 %v293
      %v295 = vextract.high.u32 %v293
      %v296 = vmul.u32 %v289, %v280
      %v297 = vadd.s32 %v292, %v294
      %vm298 = vc.u32 %v292, %v294
      %v299 = vadd.s32 %v295, 1
      %v300 = vsel %vm298, %v299, %v295
      %v301 = vadd.s32 %v296, %v300
      %v302 = vadd.s32 %v301, 536870912
      %v303 = vshrl.u32 %v302, 30
      %v304 = vshll.u32 %v303, 30
      %v305 = vsub.s32 %v301, %v304
      %vm306 = vcmp.lt.s32.totalorder %v305, 0
      %v307 = vsub.s32 0, %v305
      %v308 = vsel %vm306, %v307, %v305
      %v309 = vclz %v308
      %v310 = vsub.s32 %v309, 2
      %vm311 = vcmp.gt.s32.totalorder 0, %v310
      %v312 = vsel %vm311, 0, %v310
      %v313 = vsub.s32 32, %v312
      %v314 = vshll.u32 %v305, %v312
      %v315 = vshrl.u32 %v297, %v313
      %v316 = vor.u32 %v314, %v315
      %v317 = vsub.s32 4294967266, %v312
      %v318 = vadd.s32 %v317, 127
      %v319 = vshll.u32 %v318, 23
      %v320 = vor.u32 4788187, %v319
      %v321 = vand.u32 2147483647, %v320
      %v323 = vcvt.s32.f32 %v316
      %v324 = vmul.f32 %v323, %v321
      %v325 = vxor.u32 %v324, 2147483648
      %v326 = vsel %vm243, %v325, %v324
      %v327 = vsub.s32 4, %v303
      %v328 = vsel %vm243, %v327, %v303
      %v329 = vsel %vm242, %v239, %v326
      %v330 = vsel %vm242, 0, %v328
      %v331 = vcosq.f32.pop %v329
      %v332 = vsinq.f32.pop %v329
      %vm333 = vweird.f32 %v239
      %v334 = vand.u32 %v330, 3
      %vm335 = vcmp.lt.s32.totalorder %v334, 2
      %vm336 = vcmp.eq.s32.totalorder %v334, 0
      %v337 = vxor.u32 %v332, 2147483648
      %v338 = vsel %vm336, %v331, %v337
      %vm339 = vcmp.eq.s32.totalorder %v334, 2
      %v340 = vxor.u32 %v331, 2147483648
      %v341 = vsel %vm339, %v340, %v332
      %v342 = vsel %vm335, %v338, %v341
      %v343 = vsel %vm333, nan, %v342
      %v344 = vand.u32 2147483647, %v240
      %vm345 = vcmp.le.f32.partialorder %v344, 0.7853982
      %vm346 = vcmp.lt.s32.totalorder %v240, 0
      %v347 = vand.u32 %v240, 2139095040
      %v348 = vshrl.u32 %v347, 23
      %v349 = vsub.s32 %v348, 127
      %v350 = vand.u32 2147483647, %v240
      %v351 = vand.u32 %v350, 8388607
      %v352 = vor.u32 %v351, 8388608
      %v353 = vsub.s32 0, %v352
      %v354 = vadd.s32 %v349, 1
      %vm355 = vcmp.gt.s32.totalorder %v354, 0
      %v356 = vsel %vm355, %v354, 0
      %v357 = vshrl.u32 %v356, 5
      %v358 = vand.u32 %v356, 31
      %v359 = vsub.s32 32, %v358
      %v360 = vshrl.u32 683565275, %v359
      %v361 = vshll.u32 683565275, %v358
      %v362 = vshrl.u32 2475754826, %v359
      %v363 = vor.u32 %v361, %v362
      %v364 = vshll.u32 2475754826, %v358
      %v365 = vshrl.u32 2131351028, %v359
      %v366 = vor.u32 %v364, %v365
      %v367 = vshll.u32 2131351028, %v358
      %v368 = vshrl.u32 2102212464, %v359
      %v369 = vor.u32 %v367, %v368
      %v370 = vshll.u32 2102212464, %v358
      %v371 = vshrl.u32 920167782, %v359
      %v372 = vor.u32 %v370, %v371
      %v373 = vshll.u32 920167782, %v358
      %v374 = vshrl.u32 1326507024, %v359
      %v375 = vor.u32 %v373, %v374
      %vm376 = vcmp.lt.s32.totalorder %v357, 1
      %vm377 = vcmp.lt.s32.totalorder %v357, 2
      %vm378 = vcmp.lt.s32.totalorder %v357, 3
      %vm379 = vcmp.lt.s32.totalorder %v357, 4
      %v380 = vsel %vm376, %v360, %v363
      %v381 = vsel %vm379, %v369, 2102212464
      %v382 = vsel %vm378, %v366, %v381
      %v383 = vsel %vm377, %v380, %v382
      %v384 = vsel %vm376, %v363, %v366
      %v385 = vsel %vm379, %v372, 920167782
      %v386 = vsel %vm378, %v369, %v385
      %v387 = vsel %vm377, %v384, %v386
      %v388 = vsel %vm376, %v366, %v369
      %v389 = vsel %vm379, %v375, 1326507024
      %v390 = vsel %vm378, %v372, %v389
      %v391 = vsel %vm377, %v388, %v390
      %v392 = vshll.u32 %v352, 8
      %v393 = vmul.u32.u64.compose %v392, %v391
      %v394 = vextract.low.u32 %v393
      %v395 = vextract.high.u32 %v393
      %v396 = vmul.u32.u64.compose %v392, %v387
      %v397 = vextract.low.u32 %v396
      %v398 = vextract.high.u32 %v396
      %v399 = vmul.u32 %v392, %v383
      %v400 = vadd.s32 %v395, %v397
      %vm401 = vc.u32 %v395, %v397
      %v402 = vadd.s32 %v398, 1
      %v403 = vsel %vm401, %v402, %v398
      %v404 = vadd.s32 %v399, %v403
      %v405 = vadd.s32 %v404, 536870912
      %v406 = vshrl.u32 %v405, 30
      %v407 = vshll.u32 %v406, 30
      %v408 = vsub.s32 %v404, %v407
      %vm409 = vcmp.lt.s32.totalorder %v408, 0
      %v410 = vsub.s32 0, %v408
      %v411 = vsel %vm409, %v410, %v408
      %v412 = vclz %v411
      %v413 = vsub.s32 %v412, 2
      %vm414 = vcmp.gt.s32.totalorder 0, %v413
      %v415 = vsel %vm414, 0, %v413
      %v416 = vsub.s32 32, %v415
      %v417 = vshll.u32 %v408, %v415
      %v418 = vshrl.u32 %v400, %v416
      %v419 = vor.u32 %v417, %v418
      %v420 = vsub.s32 4294967266, %v415
      %v421 = vadd.s32 %v420, 127
      %v422 = vshll.u32 %v421, 23
      %v423 = vor.u32 4788187, %v422
      %v424 = vand.u32 2147483647, %v423
      %v426 = vcvt.s32.f32 %v419
      %v427 = vmul.f32 %v426, %v424
      %v428 = vxor.u32 %v427, 2147483648
      %v429 = vsel %vm346, %v428, %v427
      %v430 = vsub.s32 4, %v406
      %v431 = vsel %vm346, %v430, %v406
      %v432 = vsel %vm345, %v240, %v429
      %v433 = vsel %vm345, 0, %v431
      %v434 = vcosq.f32.pop %v432
      %v435 = vsinq.f32.pop %v432
      %vm436 = vweird.f32 %v240
      %v437 = vand.u32 %v433, 3
      %vm438 = vcmp.lt.s32.totalorder %v437, 2
      %vm439 = vcmp.eq.s32.totalorder %v437, 0
      %v440 = vxor.u32 %v435, 2147483648
      %v441 = vsel %vm439, %v434, %v440
      %vm442 = vcmp.eq.s32.totalorder %v437, 2
      %v443 = vxor.u32 %v434, 2147483648
      %v444 = vsel %vm442, %v443, %v435
      %v445 = vsel %vm438, %v441, %v444
      %v446 = vsel %vm436, nan, %v445
      %v447 = vand.u32 2147483647, %v239
      %vm448 = vcmp.le.f32.partialorder %v447, 0.7853982
      %vm449 = vcmp.lt.s32.totalorder %v239, 0
      %v450 = vand.u32 %v239, 2139095040
      %v451 = vshrl.u32 %v450, 23
      %v452 = vsub.s32 %v451, 127
      %v453 = vand.u32 2147483647, %v239
      %v454 = vand.u32 %v453, 8388607
      %v455 = vor.u32 %v454, 8388608
      %v456 = vsub.s32 0, %v455
      %v457 = vadd.s32 %v452, 1
      %vm458 = vcmp.gt.s32.totalorder %v457, 0
      %v459 = vsel %vm458, %v457, 0
      %v460 = vshrl.u32 %v459, 5
      %v461 = vand.u32 %v459, 31
      %v462 = vsub.s32 32, %v461
      %v463 = vshrl.u32 683565275, %v462
      %v464 = vshll.u32 683565275, %v461
      %v465 = vshrl.u32 2475754826, %v462
      %v466 = vor.u32 %v464, %v465
      %v467 = vshll.u32 2475754826, %v461
      %v468 = vshrl.u32 2131351028, %v462
      %v469 = vor.u32 %v467, %v468
      %v470 = vshll.u32 2131351028, %v461
      %v471 = vshrl.u32 2102212464, %v462
      %v472 = vor.u32 %v470, %v471
      %v473 = vshll.u32 2102212464, %v461
      %v474 = vshrl.u32 920167782, %v462
      %v475 = vor.u32 %v473, %v474
      %v476 = vshll.u32 920167782, %v461
      %v477 = vshrl.u32 1326507024, %v462
      %v478 = vor.u32 %v476, %v477
      %vm479 = vcmp.lt.s32.totalorder %v460, 1
      %vm480 = vcmp.lt.s32.totalorder %v460, 2
      %vm481 = vcmp.lt.s32.totalorder %v460, 3
      %vm482 = vcmp.lt.s32.totalorder %v460, 4
      %v483 = vsel %vm479, %v463, %v466
      %v484 = vsel %vm482, %v472, 2102212464
      %v485 = vsel %vm481, %v469, %v484
      %v486 = vsel %vm480, %v483, %v485
      %v487 = vsel %vm479, %v466, %v469
      %v488 = vsel %vm482, %v475, 920167782
      %v489 = vsel %vm481, %v472, %v488
      %v490 = vsel %vm480, %v487, %v489
      %v491 = vsel %vm479, %v469, %v472
      %v492 = vsel %vm482, %v478, 1326507024
      %v493 = vsel %vm481, %v475, %v492
      %v494 = vsel %vm480, %v491, %v493
      %v495 = vshll.u32 %v455, 8
      %v496 = vmul.u32.u64.compose %v495, %v494
      %v497 = vextract.low.u32 %v496
      %v498 = vextract.high.u32 %v496
      %v499 = vmul.u32.u64.compose %v495, %v490
      %v500 = vextract.low.u32 %v499
      %v501 = vextract.high.u32 %v499
      %v502 = vmul.u32 %v495, %v486
      %v503 = vadd.s32 %v498, %v500
      %vm504 = vc.u32 %v498, %v500
      %v505 = vadd.s32 %v501, 1
      %v506 = vsel %vm504, %v505, %v501
      %v507 = vadd.s32 %v502, %v506
      %v508 = vadd.s32 %v507, 536870912
      %v509 = vshrl.u32 %v508, 30
      %v510 = vshll.u32 %v509, 30
      %v511 = vsub.s32 %v507, %v510
      %vm512 = vcmp.lt.s32.totalorder %v511, 0
      %v513 = vsub.s32 0, %v511
      %v514 = vsel %vm512, %v513, %v511
      %v515 = vclz %v514
      %v516 = vsub.s32 %v515, 2
      %vm517 = vcmp.gt.s32.totalorder 0, %v516
      %v518 = vsel %vm517, 0, %v516
      %v519 = vsub.s32 32, %v518
      %v520 = vshll.u32 %v511, %v518
      %v521 = vshrl.u32 %v503, %v519
      %v522 = vor.u32 %v520, %v521
      %v523 = vsub.s32 4294967266, %v518
      %v524 = vadd.s32 %v523, 127
      %v525 = vshll.u32 %v524, 23
      %v526 = vor.u32 4788187, %v525
      %v527 = vand.u32 2147483647, %v526
      %v529 = vcvt.s32.f32 %v522
      %v530 = vmul.f32 %v529, %v527
      %v531 = vxor.u32 %v530, 2147483648
      %v532 = vsel %vm449, %v531, %v530
      %v533 = vsub.s32 4, %v509
      %v534 = vsel %vm449, %v533, %v509
      %v535 = vsel %vm448, %v239, %v532
      %v536 = vsel %vm448, 0, %v534
      %v537 = vcosq.f32.pop %v535
      %v538 = vsinq.f32.pop %v535
      %vm539 = vweird.f32 %v239
      %v540 = vadd.s32 %v536, 3
      %v541 = vand.u32 %v540, 3
      %vm542 = vcmp.lt.s32.totalorder %v541, 2
      %vm543 = vcmp.eq.s32.totalorder %v541, 0
      %v544 = vxor.u32 %v538, 2147483648
      %v545 = vsel %vm543, %v537, %v544
      %vm546 = vcmp.eq.s32.totalorder %v541, 2
      %v547 = vxor.u32 %v537, 2147483648
      %v548 = vsel %vm546, %v547, %v538
      %v549 = vsel %vm542, %v545, %v548
      %v550 = vsel %vm539, nan, %v549
      %v551 = vand.u32 2147483647, %v240
      %vm552 = vcmp.le.f32.partialorder %v551, 0.7853982
      %vm553 = vcmp.lt.s32.totalorder %v240, 0
      %v554 = vand.u32 %v240, 2139095040
      %v555 = vshrl.u32 %v554, 23
      %v556 = vsub.s32 %v555, 127
      %v557 = vand.u32 2147483647, %v240
      %v558 = vand.u32 %v557, 8388607
      %v559 = vor.u32 %v558, 8388608
      %v560 = vsub.s32 0, %v559
      %v561 = vadd.s32 %v556, 1
      %vm562 = vcmp.gt.s32.totalorder %v561, 0
      %v563 = vsel %vm562, %v561, 0
      %v564 = vshrl.u32 %v563, 5
      %v565 = vand.u32 %v563, 31
      %v566 = vsub.s32 32, %v565
      %v567 = vshrl.u32 683565275, %v566
      %v568 = vshll.u32 683565275, %v565
      %v569 = vshrl.u32 2475754826, %v566
      %v570 = vor.u32 %v568, %v569
      %v571 = vshll.u32 2475754826, %v565
      %v572 = vshrl.u32 2131351028, %v566
      %v573 = vor.u32 %v571, %v572
      %v574 = vshll.u32 2131351028, %v565
      %v575 = vshrl.u32 2102212464, %v566
      %v576 = vor.u32 %v574, %v575
      %v577 = vshll.u32 2102212464, %v565
      %v578 = vshrl.u32 920167782, %v566
      %v579 = vor.u32 %v577, %v578
      %v580 = vshll.u32 920167782, %v565
      %v581 = vshrl.u32 1326507024, %v566
      %v582 = vor.u32 %v580, %v581
      %vm583 = vcmp.lt.s32.totalorder %v564, 1
      %vm584 = vcmp.lt.s32.totalorder %v564, 2
      %vm585 = vcmp.lt.s32.totalorder %v564, 3
      %vm586 = vcmp.lt.s32.totalorder %v564, 4
      %v587 = vsel %vm583, %v567, %v570
      %v588 = vsel %vm586, %v576, 2102212464
      %v589 = vsel %vm585, %v573, %v588
      %v590 = vsel %vm584, %v587, %v589
      %v591 = vsel %vm583, %v570, %v573
      %v592 = vsel %vm586, %v579, 920167782
      %v593 = vsel %vm585, %v576, %v592
      %v594 = vsel %vm584, %v591, %v593
      %v595 = vsel %vm583, %v573, %v576
      %v596 = vsel %vm586, %v582, 1326507024
      %v597 = vsel %vm585, %v579, %v596
      %v598 = vsel %vm584, %v595, %v597
      %v599 = vshll.u32 %v559, 8
      %v600 = vmul.u32.u64.compose %v599, %v598
      %v601 = vextract.low.u32 %v600
      %v602 = vextract.high.u32 %v600
      %v603 = vmul.u32.u64.compose %v599, %v594
      %v604 = vextract.low.u32 %v603
      %v605 = vextract.high.u32 %v603
      %v606 = vmul.u32 %v599, %v590
      %v607 = vadd.s32 %v602, %v604
      %vm608 = vc.u32 %v602, %v604
      %v609 = vadd.s32 %v605, 1
      %v610 = vsel %vm608, %v609, %v605
      %v611 = vadd.s32 %v606, %v610
      %v612 = vadd.s32 %v611, 536870912
      %v613 = vshrl.u32 %v612, 30
      %v614 = vshll.u32 %v613, 30
      %v615 = vsub.s32 %v611, %v614
      %vm616 = vcmp.lt.s32.totalorder %v615, 0
      %v617 = vsub.s32 0, %v615
      %v618 = vsel %vm616, %v617, %v615
      %v619 = vclz %v618
      %v620 = vsub.s32 %v619, 2
      %vm621 = vcmp.gt.s32.totalorder 0, %v620
      %v622 = vsel %vm621, 0, %v620
      %v623 = vsub.s32 32, %v622
      %v624 = vshll.u32 %v615, %v622
      %v625 = vshrl.u32 %v607, %v623
      %v626 = vor.u32 %v624, %v625
      %v627 = vsub.s32 4294967266, %v622
      %v628 = vadd.s32 %v627, 127
      %v629 = vshll.u32 %v628, 23
      %v630 = vor.u32 4788187, %v629
      %v631 = vand.u32 2147483647, %v630
      %v633 = vcvt.s32.f32 %v626
      %v634 = vmul.f32 %v633, %v631
      %v635 = vxor.u32 %v634, 2147483648
      %v636 = vsel %vm553, %v635, %v634
      %v637 = vsub.s32 4, %v613
      %v638 = vsel %vm553, %v637, %v613
      %v639 = vsel %vm552, %v240, %v636
      %v640 = vsel %vm552, 0, %v638
      %v641 = vcosq.f32.pop %v639
      %v642 = vsinq.f32.pop %v639
      %vm643 = vweird.f32 %v240
      %v644 = vadd.s32 %v640, 3
      %v645 = vand.u32 %v644, 3
      %vm646 = vcmp.lt.s32.totalorder %v645, 2
      %vm647 = vcmp.eq.s32.totalorder %v645, 0
      %v648 = vxor.u32 %v642, 2147483648
      %v649 = vsel %vm647, %v641, %v648
      %vm650 = vcmp.eq.s32.totalorder %v645, 2
      %v651 = vxor.u32 %v641, 2147483648
      %v652 = vsel %vm650, %v651, %v642
      %v653 = vsel %vm646, %v649, %v652
      %v654 = vsel %vm643, nan, %v653
      %657 = vrot.lane.b32.xlu0 %v343, 64
      %v658 = vpop.permute.xlu0 %657
      %659 = vrot.lane.b32.xlu0 %v446, 64
      %v660 = vpop.permute.xlu0 %659
      %vm663 = vcmask 523264
      %v664 = vsel %vm663, %v343, %v658
      %v665 = vsel %vm663, %v446, %v660
      %v666 = vsub.f32 0.0, %v550
      %v667 = vsub.f32 0.0, %v654
      %670 = vrot.lane.b32.xlu0 %v550, 64
      %v671 = vpop.permute.xlu0 %670
      %672 = vrot.lane.b32.xlu0 %v654, 64
      %v673 = vpop.permute.xlu0 %672
      %v676 = vsel %vm663, %v666, %v671
      %v677 = vsel %vm663, %v667, %v673
      %678 = vrot.lane.b32.xlu0 %v233, 64
      %v679 = vpop.permute.xlu0 %678
      %680 = vrot.lane.b32.xlu0 %v234, 64
      %v681 = vpop.permute.xlu0 %680
      %v682 = vmul.f32 %v233, %v664
      %v683 = vmul.f32 %v234, %v665
      %v684 = vmul.f32 %v679, %v676
      %v685 = vmul.f32 %v681, %v677
      %v686 = vadd.f32 %v682, %v684
      %v687 = vadd.f32 %v683, %v685
      %v688 = vsub.f32 %v686, %v237
      %v689 = vsub.f32 %v687, %v238
      %v690 = vmul.f32 %v688, %v688
      %v691 = vmul.f32 %v689, %v689
      %692 = vrot.lane.b32.xlu0 %v690, 64
      %v693 = vpop.permute.xlu0 %692
      %694 = vrot.lane.b32.xlu0 %v691, 64
      %v695 = vpop.permute.xlu0 %694
      %v696 = vadd.f32 %v690, %v693
      %v697 = vadd.f32 %v691, %v695
      %v698 = vrsqrt.pop %v696
      %v699 = vmul.f32 %v696, %v698
      %vm700 = vcmp.eq.f32.partialorder %v696, inf
      %v701 = vsel %vm700, %v696, %v699
      %vm702 = vcmp.eq.f32.partialorder %v696, 0.0
      %v703 = vand.u32 %v696, 2147483648
      %v704 = vsel %vm702, %v703, %v701
      %v705 = vrsqrt.pop %v697
      %v706 = vmul.f32 %v697, %v705
      %vm707 = vcmp.eq.f32.partialorder %v697, inf
      %v708 = vsel %vm707, %v697, %v706
      %vm709 = vcmp.eq.f32.partialorder %v697, 0.0
      %v710 = vand.u32 %v697, 2147483648
      %v711 = vsel %vm709, %v710, %v708
      %v712 = vld [vmem:[%s1] sm:$0xff]
      %v713 = vld [vmem:[%s1 + $0x8] sm:$0xff]
      %v714 = vld [vmem:[%s1 + $0x10] sm:$0xff]
      %v715 = vld [vmem:[%s1 + $0x18] sm:$0xff]
      %v716 = vld [vmem:[%s1 + $0x20] sm:$0xff]
      %v717 = vld [vmem:[%s1 + $0x28] sm:$0xff]
      %v718 = vld [vmem:[%s1 + $0x30] sm:$0xff]
      %v719 = vld [vmem:[%s1 + $0x38] sm:$0xff]
      %v720 = vld [vmem:[%s1 + $0x40] sm:$0xff]
      %v721 = vld [vmem:[%s1 + $0x48] sm:$0xff]
      %v722 = vld [vmem:[%s1 + $0x50] sm:$0xff]
      %v723 = vld [vmem:[%s1 + $0x58] sm:$0xff]
      %v724 = vld [vmem:[%s1 + $0x60] sm:$0xff]
      %v725 = vld [vmem:[%s1 + $0x68] sm:$0xff]
      %v726 = vld [vmem:[%s1 + $0x70] sm:$0xff]
      %v727 = vld [vmem:[%s1 + $0x78] sm:$0xff]
      %v728 = vld [vmem:[%s2] sm:$0x1]
      %v730 = vlaneseq
      %v731 = vshrl.u32 %v730, 7
      %v732 = vsub.s32 0, %v731
      %v733 = vrot.slane %v728, %v732
      %735 = vmatprep.subr.mxu0 0.0
      %736 = vmatpush1.msra.mxu0 %v727
      %737 = vmatprep.subr.mxu0 0.0
      %738 = vmatpush1.msra.mxu0 %v726
      %739 = vmatprep.subr.mxu0 0.0
      %740 = vmatpush1.msra.mxu0 %v725
      %741 = vmatprep.subr.mxu0 0.0
      %742 = vmatpush1.msra.mxu0 %v724
      %743 = vmatprep.subr.mxu0 0.0
      %744 = vmatpush1.msra.mxu0 %v723
      %745 = vmatprep.subr.mxu0 0.0
      %746 = vmatpush1.msra.mxu0 %v722
      %747 = vmatprep.subr.mxu0 0.0
      %748 = vmatpush1.msra.mxu0 %v721
      %749 = vmatprep.subr.mxu0 0.0
      %750 = vmatpush1.msra.mxu0 %v720
      %751 = vmatprep.subr.mxu0 0.0
      %752 = vmatpush1.msra.mxu0 %v719
      %753 = vmatprep.subr.mxu0 0.0
      %754 = vmatpush1.msra.mxu0 %v718
      %755 = vmatprep.subr.mxu0 0.0
      %756 = vmatpush1.msra.mxu0 %v717
      %757 = vmatprep.subr.mxu0 0.0
      %758 = vmatpush1.msra.mxu0 %v716
      %759 = vmatprep.subr.mxu0 0.0
      %760 = vmatpush1.msra.mxu0 %v715
      %761 = vmatprep.subr.mxu0 0.0
      %762 = vmatpush1.msra.mxu0 %v714
      %763 = vmatprep.subr.mxu0 0.0
      %764 = vmatpush1.msra.mxu0 %v713
      %765 = vmatprep.subr.mxu0 0.0
      %766 = vmatpush1.msra.mxu0 %v712
      %767 = vmatprep.subr.mxu0 0.0
      %768 = vmatpush2.msra.mxu0 0.0
      %769 = vmatprep.subr.mxu0 0.0
      %770 = vmatpush2.msra.mxu0 0.0
      %771 = vmatprep.subr.mxu0 0.0
      %772 = vmatpush2.msra.mxu0 0.0
      %773 = vmatprep.subr.mxu0 0.0
      %774 = vmatpush2.msra.mxu0 0.0
      %775 = vmatprep.subr.mxu0 0.0
      %776 = vmatpush2.msra.mxu0 0.0
      %777 = vmatprep.subr.mxu0 0.0
      %778 = vmatpush2.msra.mxu0 0.0
      %779 = vmatprep.subr.mxu0 0.0
      %780 = vmatpush2.msra.mxu0 0.0
      %781 = vmatprep.subr.mxu0 0.0
      %782 = vmatpush2.msra.mxu0 0.0
      %783 = vmatprep.subr.mxu0 0.0
      %784 = vmatpush2.msra.mxu0 0.0
      %785 = vmatprep.subr.mxu0 0.0
      %786 = vmatpush2.msra.mxu0 0.0
      %787 = vmatprep.subr.mxu0 0.0
      %788 = vmatpush2.msra.mxu0 0.0
      %789 = vmatprep.subr.mxu0 0.0
      %790 = vmatpush2.msra.mxu0 0.0
      %791 = vmatprep.subr.mxu0 0.0
      %792 = vmatpush2.msra.mxu0 0.0
      %793 = vmatprep.subr.mxu0 0.0
      %794 = vmatpush2.msra.mxu0 0.0
      %795 = vmatprep.subr.mxu0 0.0
      %796 = vmatpush2.msra.mxu0 0.0
      %797 = vmatprep.subr.mxu0 0.0
      %798 = vmatpush2.msra.mxu0 0.0
      %799 = vmatprep.mubr.f32.mxu0 0.0
      %800 = vmatmul.mubr.f32.gmra.mxu0 %v704
      %v801 = vpop.f32.mrf.mxu0
      %v802 = vadd.f32 %v733, %v801
      %v803 = vpop.f32.mrf.mxu0
      %804 = vmatprep.mubr.f32.mxu0 0.0
      %805 = vmatmul.mubr.f32.gmra.mxu0 %v711
      %v806 = vpop.f32.mrf.mxu0
      %v807 = vadd.f32 %v733, %v806
      %v808 = vpop.f32.mrf.mxu0
      %809 = vdwg.mxu0
      %v810 = vtanh.pop %v802
      %v811 = vtanh.pop %v807
      %v812 = vld [vmem:[%s3] sm:$0x1]
      %v814 = vlaneseq
      %v815 = vshrl.u32 %v814, 7
      %v816 = vsub.s32 0, %v815
      %v817 = vrot.slane %v812, %v816
      %v819 = vmul.f32 %v810, %v817
      %v820 = vmul.f32 %v811, %v817
      %821 = vadd.xlane.f32.xlu0 %v819
      %v822 = vpop.xlane.xlu0 %821
      %823 = vadd.xlane.f32.xlu0 %v820
      %v824 = vpop.xlane.xlu0 %823
      %v825 = vld [vmem:[#allocation2] sm:$0x1]
      %v827 = vlaneseq
      %v828 = vshrl.u32 %v827, 7
      %v829 = vsub.s32 0, %v828
      %v830 = vrot.slane %v825, %v829
      %v832 = vadd.f32 %v822, %v830
      %v833 = vadd.f32 %v824, %v830
      %v834 = vxor.u32 %v832, 2147483648
      %v835 = vxor.u32 %v833, 2147483648
      %v836 = vmul.f32 %v834, 1.442695
      %v837 = vpow.pop %v836
      %v838 = vmul.f32 %v835, 1.442695
      %v839 = vpow.pop %v838
      %v840 = vadd.f32 %v837, 1.0
      %v841 = vadd.f32 %v839, 1.0
      %v842 = vrcp.pop %v840
      %v843 = vmul.f32 1.0, %v842
      %v844 = vrcp.pop %v841
      %v845 = vmul.f32 1.0, %v844
      %vm846 = vcmask 7168
      %847 = vst.msk [vmem:[%s231] sm:$0xff] %vm846, %v843
      %848 = vst.msk [vmem:[%s231 + $0x8] sm:$0xff] %vm846, %v845
      %s849 = smul.u32 2, %s18
      %p850 = scmp.lt.s32.totalorder %s849, 3
      %s851 = scalar_select %p850, %s849, 3
      %s852 = smul.addr %s851, 8
      %s853 = scalar_lea.vmem %s5, %s852
      // Predicated region
      $region41: #{classifier_forward.2} parent=39 // pred_check
        %p854 = pneg %p146
      $region42: #{classifier_forward.2} parent=39 // pred_check_branch
        %856 = sbr.rel (%p854) target = $region44
      $region43: #{classifier_forward.2} parent=39 // pred_region
        %s857 = smul.u32 2, %s18
      $region44: #{classifier_forward.2} parent=39 // pred_fallthru
        _
    $region40: #{classifier_forward.2} parent=5 // pred_fallthru
      _
    %p858 = scmp.le.s32.totalorder 2, %s13
    // Predicated region
    $region45: #{classifier_forward.2} parent=5 // pred_check
      %p859 = pneg %p858
    $region46: #{classifier_forward.2} parent=5 // pred_check_branch
      %861 = sbr.rel (%p859) target = $region48
    $region47: #{classifier_forward.2} parent=5 // pred_region
      %s862 = ssub.s32 %s13, 2
      // Predicated region
      $region49: #{classifier_forward.2} parent=47 // pred_check
        %p863 = pneg %p152
      $region50: #{classifier_forward.2} parent=47 // pred_check_branch
        %865 = sbr.rel (%p863) target = $region52
      $region51: #{classifier_forward.2} parent=47 // pred_region
        %s866 = smul.u32 2, %s19
        %p867 = scmp.lt.s32.totalorder %s866, 3
        %s868 = scalar_select %p867, %s866, 3
        %s869 = smul.addr %s868, 8
        %s870 = scalar_lea.vmem %s5, %s869
      $region52: #{classifier_forward.2} parent=47 // pred_fallthru
        _
    $region48: #{classifier_forward.2} parent=5 // pred_fallthru
      _
  $region6: #{classifier_forward.2} parent=0 // loop_footer
    %s17 = sadd.s32 1, %s13
  $region7: #{classifier_forward.2} parent=0 // loop_footer_branch
    %12 = sbr.rel target = $region3
  $region8: #{classifier_forward.2} parent=0 // loop_exit
    _

</llo_original>
